<compile_context>
chip_gen: v7x
topology: tpu7x:2x2x1
jax: 0.10.0
libtpu: 0.0.40
codegen_flags: <defaults>
</compile_context>

<pallas_src>
import jax
import jax.numpy as jnp
from jax.experimental import pallas as pl
from jax.experimental.pallas import tpu as pltpu


def _masking_kernel(x_ref, m_ref, o_ref):
    # x_ref: (TILE_R, TILE_D); m_ref: (TILE_R, 1) -> broadcast along lanes.
    o_ref[...] = x_ref[...] * m_ref[...]


def _pick_tile_d(D: int) -> int:
    """Lane-axis tile: full width unless D is a very large multiple of 128."""
    if D <= 2048 or D % 128 != 0:
        return D  # full extent is always a legal block dim
    for c in range(2048, 127, -128):
        if D % c == 0:
            return c
    return D


def _pick_tile_r(R: int, max_rows: int, sub: int) -> int:
    """Largest row tile <= max_rows that divides R and is a multiple of `sub`."""
    cap = (min(R, max_rows) // sub) * sub
    c = cap
    while c >= sub:
        if R % c == 0:
            return c
        c -= sub
    return R  # fallback: one full-extent block (always legal)


def masking_layer(x: jax.Array, mask: jax.Array,
                  tile_r: int | None = None, tile_d: int | None = None) -> jax.Array:
    """out[b, t, d] = x[b, t, d] * mask[b, t]  (MaskingLayer.forward)."""
    B, T, D = x.shape
    assert mask.shape == (B, T)
    R = B * T

    itemsize = jnp.dtype(x.dtype).itemsize
    sub = {4: 8, 2: 16, 1: 32}.get(itemsize, 8)  # sublane multiple per dtype

    # Flatten to row-major 2D (pure-JAX glue; same HBM bytes, no copy semantics).
    x2 = x.reshape(R, D)
    m2 = mask.reshape(R, 1).astype(x.dtype)  # unsqueeze(-1); exact for 0/1 masks

    if tile_d is None:
        tile_d = _pick_tile_d(D)
    padded_d = ((tile_d + 127) // 128) * 128           # VMEM lane padding
    max_tile_bytes = 1 << 20                           # ~1 MiB padded per buffer
    max_rows = max(sub, max_tile_bytes // (padded_d * itemsize))
    if tile_r is None:
        tile_r = _pick_tile_r(R, max_rows, sub)

    assert R % tile_r == 0 and D % tile_d == 0, "tiles must divide flattened dims"
    grid = (R // tile_r, D // tile_d)

    # NOTE: if D < 128 at production shapes, prefer folding timesteps into the
    # lane axis at the model level so stores are lane-dense; the kernel itself
    # stays correct for any D (full-extent lane block).

    out2 = pl.pallas_call(
        _masking_kernel,
        out_shape=jax.ShapeDtypeStruct((R, D), x.dtype),
        grid_spec=pltpu.PrefetchScalarGridSpec(
            num_scalar_prefetch=0,
            grid=grid,
            in_specs=[
                pl.BlockSpec((tile_r, tile_d), lambda i, j: (i, j)),
                pl.BlockSpec((tile_r, 1), lambda i, j: (i, 0)),
            ],
            out_specs=pl.BlockSpec((tile_r, tile_d), lambda i, j: (i, j)),
        ),
        compiler_params=pltpu.CompilerParams(
            dimension_semantics=("parallel", "parallel"),
        ),
    )(x2, m2)

    return out2.reshape(B, T, D)


if __name__ == "__main__":
    key = jax.random.PRNGKey(0)

    # --- test 1: the module's natural small shape (single full-extent block) ---
    B, T, D = 2, 8, 32
    kx, km, key = jax.random.split(key, 3)
    x = jax.random.normal(kx, (B, T, D), dtype=jnp.float32)
    mask = (jax.random.uniform(km, (B, T)) > 0.3).astype(jnp.float32)

    out = jax.block_until_ready(masking_layer(x, mask))
    ref = x * mask[:, :, None]
    assert out.shape == (B, T, D)
    assert jnp.allclose(out, ref, atol=1e-6), "mismatch vs reference (test 1)"

    # --- test 2: exercise the row-tiled multi-step grid with aligned (8,128) blocks ---
    B2, T2, D2 = 2, 32, 128
    kx2, km2, key = jax.random.split(key, 3)
    x2 = jax.random.normal(kx2, (B2, T2, D2), dtype=jnp.float32)
    mask2 = (jax.random.uniform(km2, (B2, T2)) > 0.5).astype(jnp.float32)

    out2 = jax.block_until_ready(masking_layer(x2, mask2, tile_r=8, tile_d=128))
    ref2 = x2 * mask2[:, :, None]
    assert jnp.allclose(out2, ref2, atol=1e-6), "mismatch vs reference (test 2)"

    print("KERNEL_OK")
</pallas_src>

<mosaic_0001>
module attributes {stable_mosaic.version = 11 : i64} {
  func.func @_masking_kernel(%arg0: i32, %arg1: i32, %arg2: memref<16x32xf32, #tpu.memory_space<vmem>>, %arg3: memref<16x1xf32, #tpu.memory_space<vmem>>, %arg4: memref<16x32xf32, #tpu.memory_space<vmem>>) attributes {dimension_semantics = [#tpu.dimension_semantics<parallel>, #tpu.dimension_semantics<parallel>], iteration_bounds = array<i64: 1, 1>, scalar_prefetch = 0 : i64, scratch_operands = 0 : i64, tpu.core_type = #tpu.core_type<tc>, window_params = [{transform_indices = @transform_0, window_bounds = array<i64: 16, 32>}, {transform_indices = @transform_1, window_bounds = array<i64: 16, 1>}, {transform_indices = @transform_2, window_bounds = array<i64: 16, 32>}]} {
    %c0 = arith.constant 0 : index
    %c0_0 = arith.constant 0 : index
    %0 = vector.load %arg2[%c0, %c0_0] : memref<16x32xf32, #tpu.memory_space<vmem>>, vector<16x32xf32>
    %c0_1 = arith.constant 0 : index
    %c0_2 = arith.constant 0 : index
    %1 = vector.load %arg3[%c0_1, %c0_2] : memref<16x1xf32, #tpu.memory_space<vmem>>, vector<16x1xf32>
    %2 = vector.broadcast %1 : vector<16x1xf32> to vector<16x32xf32>
    %3 = arith.mulf %0, %2 : vector<16x32xf32>
    %c0_3 = arith.constant 0 : index
    %c0_4 = arith.constant 0 : index
    %4 = vector.load %arg4[%c0_3, %c0_4] : memref<16x32xf32, #tpu.memory_space<vmem>>, vector<16x32xf32>
    tpu.vector_store %arg4[%c0_3, %c0_4], %3 {strides = array<i32>} : memref<16x32xf32, #tpu.memory_space<vmem>>, vector<16x32xf32>,
    return
  }
  func.func @transform_0(%arg0: i32, %arg1: i32) -> (i32, i32) {
    %c0_i32 = arith.constant 0 : i32
    return %arg0, %arg1 : i32, i32
  }
  func.func @transform_1(%arg0: i32, %arg1: i32) -> (i32, i32) {
    %c0_i32 = arith.constant 0 : i32
    %c0_i32_0 = arith.constant 0 : i32
    return %arg0, %c0_i32 : i32, i32
  }
  func.func @transform_2(%arg0: i32, %arg1: i32) -> (i32, i32) {
    %c0_i32 = arith.constant 0 : i32
    return %arg0, %arg1 : i32, i32
  }
}

</mosaic_0001>

<llo_original>
// kernel: tpu_custom_call.1
$region0: #{tpu_custom_call.1}
  #allocation0 [shape = 'u32[]', space=smem, size = 0x4, offset = 0x4, fixed_abs, tag = 'smem constant byte address 0x4 - core index']
  #allocation1 [shape = 'u32[144,128]{1,0:T(1,128)}', space=vmem, size = 0x12000, scoped, tag = 'internal scratch']
  %s0 = inlined_call_operand.vmem [shape: f32[16,32], index: 0, kind: input, shape index: {}]
  %s1 = inlined_call_operand.vmem [shape: f32[16,1], index: 1, kind: input, shape index: {}]
  %s2 = inlined_call_operand.hbm [shape: f32[16,32], index: 2, kind: output, shape index: {}]
  %s3 = sld [smem:[#allocation0]]
  $region18: #{tpu_custom_call.1} parent=0
    _
  %s5 = ssub.s32 1, %s3
  %s6 = scalar_select 0, %s5, %s3
  $region1: #{tpu_custom_call.1} parent=0
    #allocation2 [shape = 'u8[8192]{0}', space=vmem, size = 0x2000, scoped, tag = 'output window, operand 0, single buffered']
    #allocation3 [shape = 's32[1]{0}', space=sflag, size = 0x4, scoped, tag = 'scoped memory for tpu_custom_call.1']
    %7 = vsyncpa [#allocation3], 0
    // Predicated region
    $region2: #{tpu_custom_call.1} parent=1 // pred_check
      _
    $region3: #{tpu_custom_call.1} parent=1 // pred_check_branch
      %9 = sbr.rel (0) target = $region5
    $region4: #{tpu_custom_call.1} parent=1 // pred_region
      _
    $region5: #{tpu_custom_call.1} parent=1 // pred_fallthru
      _
    // Predicated region
    $region6: #{tpu_custom_call.1} parent=1 // pred_check
      _
    $region7: #{tpu_custom_call.1} parent=1 // pred_check_branch
      %11 = sbr.rel (0) target = $region9
    $region8: #{tpu_custom_call.1} parent=1 // pred_region
      _
    $region9: #{tpu_custom_call.1} parent=1 // pred_fallthru
      _
    %v12 = vld [vmem:[%s0] sm:$0xff]
    %v13 = vld [vmem:[%s0 + $0x8] sm:$0xff]
    %v14 = vld [vmem:[%s1] sm:$0xff]
    %v15 = vld [vmem:[%s1 + $0x8] sm:$0xff]
    %17 = vset.pattern.permute.xlu0 0
    %18 = vperm.xlu0 %17, %v14
    %v19 = vpop.permute.xlu0 %18
    %22 = vset.pattern.permute.xlu0 0
    %23 = vperm.xlu0 %22, %v15
    %v24 = vpop.permute.xlu0 %23
    %v26 = vmul.f32 %v12, %v19
    %v27 = vmul.f32 %v13, %v24
    %vm28 = vcmask 261120
    %29 = vst.msk [vmem:[#allocation2] sm:$0xff] %vm28, %v26
    %30 = vst.msk [vmem:[#allocation2 + $0x8] sm:$0xff] %vm28, %v27
    // Predicated region
    $region10: #{tpu_custom_call.1} parent=1 // pred_check
      _
    $region11: #{tpu_custom_call.1} parent=1 // pred_check_branch
      %32 = sbr.rel (0) target = $region13
    $region12: #{tpu_custom_call.1} parent=1 // pred_region
      %s34 = ssub.s32 256, 256
      %35 = vsyncadd [#allocation3], %s34
      %s36 = sshll.u32 [#allocation2], 4
      %s37 = int_to_ptr.vmem [resolvable:$true] %s36
      %42 = dma.vmem_to_hbm [thread:$0]  %s37, 256, %s2, [#allocation3], 128, 128, 8
    $region13: #{tpu_custom_call.1} parent=1 // pred_fallthru
      _
    // Predicated region
    $region14: #{tpu_custom_call.1} parent=1 // pred_check
      _
    $region15: #{tpu_custom_call.1} parent=1 // pred_check_branch
      %44 = sbr.rel (0) target = $region17
    $region16: #{tpu_custom_call.1} parent=1 // pred_region
      %45 = dma.done [#allocation3], 256
    $region17: #{tpu_custom_call.1} parent=1 // pred_fallthru
      _
    %46 = vsyncpa [#allocation3], 1

</llo_original>
